<compile_context>
chip_gen: v7x
topology: tpu7x:2x2x1
jax: 0.10.0
libtpu: 0.0.40
codegen_flags: <defaults>
</compile_context>

<pallas_src>
from functools import partial

import jax
import jax.numpy as jnp
from jax.experimental import pallas as pl
from jax.experimental.pallas import tpu as pltpu

LANE = 128     # vreg lane width
SUBLANE = 8    # vreg sublane count (f32)


def _round_up(x, m):
    return (x + m - 1) // m * m


def _cdiv(a, b):
    return -(-a // b)


def _linear_kernel(x_ref, wt_ref, b_ref, o_ref):
    # out = x @ W^T + b ; W^T already materialized as wt_ref [d_in, OUT_pad].
    acc = jnp.dot(x_ref[...], wt_ref[...], preferred_element_type=jnp.float32)
    o_ref[...] = (acc + b_ref[...]).astype(o_ref.dtype)


@partial(jax.jit, static_argnames=("d_out", "block_rows"))
def pallas_linear(x, wt_pad, b_pad, *, d_out, block_rows=2048):
    """y = x @ weight.T + bias  (PyTorch nn.Linear semantics).

    x:      [N, d_in]          float32 (d_in left at true width; no K padding)
    wt_pad: [d_in, OUT_pad]    float32 (pre-transposed, OUT zero-padded to 128s)
    b_pad:  [1, OUT_pad]       float32 (zero-padded to 128s)
    returns [N, d_out]         float32
    """
    n, d_in = x.shape
    d_in_w, d_out_p = wt_pad.shape
    assert d_in_w == d_in

    if n <= block_rows:
        # Small-N path: gridless, single full-block call (everything in VMEM).
        # Avoids pipeline prologue/epilogue bookkeeping of a degenerate grid.
        n_p = _round_up(max(n, SUBLANE), SUBLANE)
        x_p = x if n_p == n else jnp.pad(x, ((0, n_p - n), (0, 0)))
        out_p = pl.pallas_call(
            _linear_kernel,
            out_shape=jax.ShapeDtypeStruct((n_p, d_out_p), x.dtype),
        )(x_p, wt_pad, b_pad)
    else:
        # Large-N path: tile only the row dimension; W and bias stay resident
        # (same block index every step -> fetched once). Row axis is "parallel"
        # so v7x's two TensorCores split the row tiles. No padded x copy: the
        # partial last block's out-of-range rows are masked on the output store
        # (safe: rows are not a reduction axis).
        num_tiles = _cdiv(n, block_rows)
        if num_tiles % 2:                      # even tile count for v7x 2-TC balance
            num_tiles += 1
        num_tiles = max(num_tiles, 2)
        tm = _round_up(_cdiv(n, num_tiles), SUBLANE)
        out_p = pl.pallas_call(
            _linear_kernel,
            out_shape=jax.ShapeDtypeStruct((n, d_out_p), x.dtype),
            grid=(pl.cdiv(n, tm),),
            in_specs=[
                pl.BlockSpec((tm, d_in), lambda i: (i, 0)),       # last dim = full K
                pl.BlockSpec((d_in, d_out_p), lambda i: (0, 0)),  # resident W^T
                pl.BlockSpec((1, d_out_p), lambda i: (0, 0)),     # resident bias
            ],
            out_specs=pl.BlockSpec((tm, d_out_p), lambda i: (i, 0)),
            compiler_params=pltpu.CompilerParams(
                dimension_semantics=("parallel",)),
        )(x, wt_pad, b_pad)

    return out_p[:n, :d_out]


class LinearModel:
    """Stand-in for the wrapped nn.Module (a single Linear layer)."""

    def __init__(self, d_in, d_out, key):
        kw, kb = jax.random.split(key)
        bound = 1.0 / (float(d_in) ** 0.5)   # nn.Linear uniform(-1/sqrt(in), 1/sqrt(in))
        self.weight = jax.random.uniform(kw, (d_out, d_in), jnp.float32, -bound, bound)
        self.bias = jax.random.uniform(kb, (d_out,), jnp.float32, -bound, bound)
        self.d_out = d_out

        # One-time glue at init (NOT per forward): transpose W, zero-pad ONLY the
        # output dim to a 128 multiple (lane-dense stores). K is left unpadded —
        # padding the contraction dim only adds HBM bytes and zero-FLOPs.
        d_out_p = _round_up(d_out, LANE)
        wt = self.weight.T                                        # [d_in, d_out]
        self.wt_pad = jnp.pad(wt, ((0, 0), (0, d_out_p - d_out)))
        self.b_pad = jnp.pad(self.bias.reshape(1, d_out),
                             ((0, 0), (0, d_out_p - d_out)))

    def __call__(self, x):
        return pallas_linear(x, self.wt_pad, self.b_pad, d_out=self.d_out)


class DummyDDP:
    """Exact analogue of the PyTorch DummyDDP: forward delegates to self.module."""

    def __init__(self, model):
        self.module = model

    def __call__(self, *inputs, **kwargs):
        return self.module(*inputs, **kwargs)


if __name__ == "__main__":
    key = jax.random.PRNGKey(0)
    k_x, k_m, k_big = jax.random.split(key, 3)

    batch, seq, hidden = 2, 8, 32
    x = jax.random.normal(k_x, (batch * seq, hidden), jnp.float32)  # [16, 32]

    model = LinearModel(hidden, hidden, k_m)
    ddp = DummyDDP(model)

    # Small path (the shapes implied by the module's toy usage).
    y = ddp(x)
    y = jax.block_until_ready(y)
    y_ref = x @ model.weight.T + model.bias
    assert y.shape == (batch * seq, hidden)
    assert jnp.allclose(y, y_ref, atol=1e-5, rtol=1e-5)

    # Large/tiled path with N not a multiple of the tile (exercises partial
    # last-block output masking, per the review's correctness caution).
    x_big = jax.random.normal(k_big, (2600, hidden), jnp.float32)
    y_big = jax.block_until_ready(ddp(x_big))
    y_big_ref = x_big @ model.weight.T + model.bias
    assert y_big.shape == (2600, hidden)
    assert jnp.allclose(y_big, y_big_ref, atol=1e-4, rtol=1e-5)

    print("KERNEL_OK")
</pallas_src>

<mosaic_0001>
module attributes {stable_mosaic.version = 11 : i64} {
  func.func @_linear_kernel(%arg0: memref<16x32xf32, #tpu.memory_space<vmem>>, %arg1: memref<32x128xf32, #tpu.memory_space<vmem>>, %arg2: memref<1x128xf32, #tpu.memory_space<vmem>>, %arg3: memref<16x128xf32, #tpu.memory_space<vmem>>) attributes {dimension_semantics = [], scalar_prefetch = 0 : i64, scratch_operands = 0 : i64, tpu.core_type = #tpu.core_type<tc>} {
    %c0 = arith.constant 0 : index
    %c0_0 = arith.constant 0 : index
    %0 = vector.load %arg0[%c0, %c0_0] : memref<16x32xf32, #tpu.memory_space<vmem>>, vector<16x32xf32>
    %c0_1 = arith.constant 0 : index
    %c0_2 = arith.constant 0 : index
    %1 = vector.load %arg1[%c0_1, %c0_2] : memref<32x128xf32, #tpu.memory_space<vmem>>, vector<32x128xf32>
    %cst = arith.constant dense<0.000000e+00> : vector<16x128xf32>
    %2 = tpu.matmul %0, %1, %cst {dimension_numbers = #tpu.dot_dimension_numbers<[1], [0], [0], [1], [0, 0, 1, 1], [], []>} : vector<16x32xf32>, vector<32x128xf32>, vector<16x128xf32> -> vector<16x128xf32>
    %c0_3 = arith.constant 0 : index
    %c0_4 = arith.constant 0 : index
    %3 = vector.load %arg2[%c0_3, %c0_4] : memref<1x128xf32, #tpu.memory_space<vmem>>, vector<1x128xf32>
    %4 = vector.broadcast %3 : vector<1x128xf32> to vector<16x128xf32>
    %5 = arith.addf %2, %4 : vector<16x128xf32>
    %c0_5 = arith.constant 0 : index
    %c0_6 = arith.constant 0 : index
    %6 = vector.load %arg3[%c0_5, %c0_6] : memref<16x128xf32, #tpu.memory_space<vmem>>, vector<16x128xf32>
    tpu.vector_store %arg3[%c0_5, %c0_6], %5 {strides = array<i32>} : memref<16x128xf32, #tpu.memory_space<vmem>>, vector<16x128xf32>,
    return
  }
}

</mosaic_0001>

<llo_original>
// kernel: pallas_linear.1
$region0: #{pallas_linear.1}
  #allocation0 [shape = 'u32[]', space=smem, size = 0x4, offset = 0x4, fixed_abs, tag = 'smem constant byte address 0x4 - core index']
  #allocation1 [shape = 'u32[144,128]{1,0:T(1,128)}', space=vmem, size = 0x12000, scoped, tag = 'internal scratch']
  %s0 = inlined_call_operand.hbm [shape: f32[16,32], index: 0, kind: input, shape index: {}]
  %s1 = inlined_call_operand.hbm [shape: f32[32,128], index: 1, kind: input, shape index: {}]
  %s2 = inlined_call_operand.vmem [shape: f32[1,128], index: 2, kind: input, shape index: {}]
  %s3 = inlined_call_operand.hbm [shape: f32[16,128], index: 3, kind: output, shape index: {}]
  %s4 = sld [smem:[#allocation0]]
  $region30: #{pallas_linear.1} parent=0
    _
  %s6 = ssub.s32 1, %s4
  %s7 = scalar_select 0, %s6, %s4
  $region1: #{pallas_linear.1} parent=0
    #allocation2 [shape = 'u8[8192]{0}', space=vmem, size = 0x2000, scoped, tag = 'input window, operand 0, single buffered']
    #allocation3 [shape = 's32[1]{0}', space=sflag, size = 0x4, scoped, tag = 'scoped memory for pallas_linear.1']
    #allocation4 [shape = 's32[1]{0}', space=sflag, size = 0x4, scoped, tag = 'scoped memory for pallas_linear.1']
    #allocation5 [shape = 'u8[16384]{0}', space=vmem, size = 0x4000, scoped, tag = 'input window, operand 1, single buffered']
    #allocation6 [shape = 's32[1]{0}', space=sflag, size = 0x4, scoped, tag = 'scoped memory for pallas_linear.1']
    #allocation7 [shape = 'u8[8192]{0}', space=vmem, size = 0x2000, scoped, tag = 'output window, operand 0, single buffered']
    %8 = vsyncpa [#allocation3], 0
    %9 = vsyncpa [#allocation6], 0
    %10 = vsyncpa [#allocation4], 0
    // Predicated region
    $region2: #{pallas_linear.1} parent=1 // pred_check
      _
    $region3: #{pallas_linear.1} parent=1 // pred_check_branch
      %12 = sbr.rel (0) target = $region5
    $region4: #{pallas_linear.1} parent=1 // pred_region
      %s14 = ssub.s32 256, 256
      %15 = vsyncadd [#allocation3], %s14
      %s16 = sshll.u32 [#allocation2], 4
      %s17 = int_to_ptr.vmem [resolvable:$true] %s16
      %22 = dma.hbm_to_vmem [thread:$0]  %s0, 256, %s17, [#allocation3], 128, 128, 8
    $region5: #{pallas_linear.1} parent=1 // pred_fallthru
      _
    // Predicated region
    $region6: #{pallas_linear.1} parent=1 // pred_check
      _
    $region7: #{pallas_linear.1} parent=1 // pred_check_branch
      %24 = sbr.rel (0) target = $region9
    $region8: #{pallas_linear.1} parent=1 // pred_region
      %s26 = ssub.s32 512, 512
      %27 = vsyncadd [#allocation6], %s26
      %s28 = sshll.u32 [#allocation5], 4
      %s29 = int_to_ptr.vmem [resolvable:$true] %s28
      %34 = dma.hbm_to_vmem [thread:$0]  %s1, 512, %s29, [#allocation6], 128, 128, 8
    $region9: #{pallas_linear.1} parent=1 // pred_fallthru
      _
    // Predicated region
    $region10: #{pallas_linear.1} parent=1 // pred_check
      _
    $region11: #{pallas_linear.1} parent=1 // pred_check_branch
      %36 = sbr.rel (0) target = $region13
    $region12: #{pallas_linear.1} parent=1 // pred_region
      _
    $region13: #{pallas_linear.1} parent=1 // pred_fallthru
      _
    // Predicated region
    $region14: #{pallas_linear.1} parent=1 // pred_check
      _
    $region15: #{pallas_linear.1} parent=1 // pred_check_branch
      %38 = sbr.rel (0) target = $region17
    $region16: #{pallas_linear.1} parent=1 // pred_region
      %39 = dma.done [#allocation3], 256
    $region17: #{pallas_linear.1} parent=1 // pred_fallthru
      _
    // Predicated region
    $region18: #{pallas_linear.1} parent=1 // pred_check
      _
    $region19: #{pallas_linear.1} parent=1 // pred_check_branch
      %41 = sbr.rel (0) target = $region21
    $region20: #{pallas_linear.1} parent=1 // pred_region
      %42 = dma.done [#allocation6], 512
    $region21: #{pallas_linear.1} parent=1 // pred_fallthru
      _
    %v43 = vld [vmem:[#allocation2] sm:$0xff]
    %v44 = vld [vmem:[#allocation2 + $0x8] sm:$0xff]
    %v45 = vld [vmem:[#allocation5] sm:$0xff]
    %v46 = vld [vmem:[#allocation5 + $0x8] sm:$0xff]
    %v47 = vld [vmem:[#allocation5 + $0x10] sm:$0xff]
    %v48 = vld [vmem:[#allocation5 + $0x18] sm:$0xff]
    %v49 = vld [vmem:[%s2] sm:$0x1]
    %v51 = vlaneseq
    %v52 = vshrl.u32 %v51, 7
    %v53 = vsub.s32 0, %v52
    %v54 = vrot.slane %v49, %v53
    %vm56 = vcmask 261120
    %v58 = vsel %vm56, %v43, 0
    %v61 = vsel %vm56, %v44, 0
    %63 = vmatprep.subr.mxu0 0.0
    %64 = vmatpush1.msra.mxu0 %v45
    %65 = vmatprep.subr.mxu0 0.0
    %66 = vmatpush1.msra.mxu0 %v46
    %67 = vmatprep.subr.mxu0 0.0
    %68 = vmatpush1.msra.mxu0 %v47
    %69 = vmatprep.subr.mxu0 0.0
    %70 = vmatpush1.msra.mxu0 %v48
    %71 = vmatprep.subr.mxu0 0.0
    %72 = vmatpush1.msra.mxu0 0.0
    %73 = vmatprep.subr.mxu0 0.0
    %74 = vmatpush1.msra.mxu0 0.0
    %75 = vmatprep.subr.mxu0 0.0
    %76 = vmatpush1.msra.mxu0 0.0
    %77 = vmatprep.subr.mxu0 0.0
    %78 = vmatpush1.msra.mxu0 0.0
    %79 = vmatprep.subr.mxu0 0.0
    %80 = vmatpush1.msra.mxu0 0.0
    %81 = vmatprep.subr.mxu0 0.0
    %82 = vmatpush1.msra.mxu0 0.0
    %83 = vmatprep.subr.mxu0 0.0
    %84 = vmatpush1.msra.mxu0 0.0
    %85 = vmatprep.subr.mxu0 0.0
    %86 = vmatpush1.msra.mxu0 0.0
    %87 = vmatprep.subr.mxu0 0.0
    %88 = vmatpush1.msra.mxu0 0.0
    %89 = vmatprep.subr.mxu0 0.0
    %90 = vmatpush1.msra.mxu0 0.0
    %91 = vmatprep.subr.mxu0 0.0
    %92 = vmatpush1.msra.mxu0 0.0
    %93 = vmatprep.subr.mxu0 0.0
    %94 = vmatpush1.msra.mxu0 0.0
    %95 = vmatprep.subr.mxu0 0.0
    %96 = vmatpush1.msra.mxu0 0.0
    %97 = vmatprep.subr.mxu0 0.0
    %98 = vmatpush1.msra.mxu0 0.0
    %99 = vmatprep.subr.mxu0 0.0
    %100 = vmatpush1.msra.mxu0 0.0
    %101 = vmatprep.subr.mxu0 0.0
    %102 = vmatpush1.msra.mxu0 0.0
    %103 = vmatprep.subr.mxu0 0.0
    %104 = vmatpush1.msra.mxu0 0.0
    %105 = vmatprep.subr.mxu0 0.0
    %106 = vmatpush1.msra.mxu0 0.0
    %107 = vmatprep.subr.mxu0 0.0
    %108 = vmatpush1.msra.mxu0 0.0
    %109 = vmatprep.subr.mxu0 0.0
    %110 = vmatpush1.msra.mxu0 0.0
    %111 = vmatprep.subr.mxu0 0.0
    %112 = vmatpush1.msra.mxu0 0.0
    %113 = vmatprep.subr.mxu0 0.0
    %114 = vmatpush1.msra.mxu0 0.0
    %115 = vmatprep.subr.mxu0 0.0
    %116 = vmatpush1.msra.mxu0 0.0
    %117 = vmatprep.subr.mxu0 0.0
    %118 = vmatpush1.msra.mxu0 0.0
    %119 = vmatprep.subr.mxu0 0.0
    %120 = vmatpush1.msra.mxu0 0.0
    %121 = vmatprep.subr.mxu0 0.0
    %122 = vmatpush1.msra.mxu0 0.0
    %123 = vmatprep.subr.mxu0 0.0
    %124 = vmatpush1.msra.mxu0 0.0
    %125 = vmatprep.subr.mxu0 0.0
    %126 = vmatpush1.msra.mxu0 0.0
    %127 = vmatprep.mubr.f32.mxu0 0.0
    %128 = vmatmul.mubr.f32.gmra.mrb[0].mxu0 %v58
    %v129 = vpop.f32.mrb[0].mxu0
    %v130 = vadd.f32 %v54, %v129
    %v131 = vpop.f32.mrb[0].mxu0
    %132 = vmatprep.mubr.f32.mxu0 0.0
    %133 = vmatmul.mubr.f32.gmra.mrb[0].mxu0 %v61
    %v134 = vpop.f32.mrb[0].mxu0
    %v135 = vadd.f32 %v54, %v134
    %v136 = vpop.f32.mrb[0].mxu0
    %137 = vdwg.mxu0
    %138 = vst [vmem:[#allocation7] sm:$0xff] %v130
    %139 = vst [vmem:[#allocation7 + $0x8] sm:$0xff] %v135
    // Predicated region
    $region22: #{pallas_linear.1} parent=1 // pred_check
      _
    $region23: #{pallas_linear.1} parent=1 // pred_check_branch
      %141 = sbr.rel (0) target = $region25
    $region24: #{pallas_linear.1} parent=1 // pred_region
      %s143 = ssub.s32 256, 256
      %144 = vsyncadd [#allocation4], %s143
      %s145 = sshll.u32 [#allocation7], 4
      %s146 = int_to_ptr.vmem [resolvable:$true] %s145
      %151 = dma.vmem_to_hbm [thread:$0]  %s146, 256, %s3, [#allocation4], 128, 128, 8
    $region25: #{pallas_linear.1} parent=1 // pred_fallthru
      _
    // Predicated region
    $region26: #{pallas_linear.1} parent=1 // pred_check
      _
    $region27: #{pallas_linear.1} parent=1 // pred_check_branch
      %153 = sbr.rel (0) target = $region29
    $region28: #{pallas_linear.1} parent=1 // pred_region
      %154 = dma.done [#allocation4], 256
    $region29: #{pallas_linear.1} parent=1 // pred_fallthru
      _
    %155 = vsyncpa [#allocation3], 1
    %156 = vsyncpa [#allocation6], 1
    %157 = vsyncpa [#allocation4], 1

</llo_original>
